<compile_context>
chip_gen: v7x
topology: tpu7x:2x2x1
jax: 0.10.0
libtpu: 0.0.40
codegen_flags: <defaults>
</compile_context>

<pallas_src>
import functools

import numpy as np

import jax
import jax.numpy as jnp
from jax.experimental import pallas as pl
from jax.experimental.pallas import tpu as pltpu


# --------------------------------------------------------------------------
# geometry helpers
# --------------------------------------------------------------------------

def _round_up(x, m):
    return ((x + m - 1) // m) * m


def _pick_v_tile(total):
    """Largest 128-multiple tile from a fixed menu that still gives >= 2 grid steps."""
    for cand in (1024, 512, 256, 128):
        if total % cand == 0 and total // cand >= 2:
            return cand
    return total


def _grid_geometry(resolution, kernel_size):
    """Flattened padded-grid geometry shared by all voxel-side kernels.

    Voxel (x, y, z) of the R^3 grid lives at canonical flat index
        q = (x+p)*Rp^2 + (y+p)*Rp + (z+p),  Rp = R + 2p,  p = k // 2,
    so a conv tap (i, j, l) is the constant flat shift s = (i-p)*Rp^2+(j-p)*Rp+(l-p).
    The conv input additionally carries a zero extension of s_left (128-aligned,
    >= |s|max) on the left and >= |s|max on the right, so every shifted read is a plain
    in-bounds static slice.  Lane dims are rounded up to multiples of 128.
    """
    assert kernel_size % 2 == 1, "only odd kernel sizes are supported"
    r = int(resolution)
    p = kernel_size // 2
    rp = r + 2 * p
    vp_raw = rp ** 3
    s_max = p * rp * rp + p * rp + p
    s_left = _round_up(max(s_max, 1), 128)
    v_out = _round_up(vp_raw, 128)
    v_ext = _round_up(v_out + s_left + s_max, 128)
    return r, p, rp, vp_raw, s_max, s_left, v_out, v_ext


# --------------------------------------------------------------------------
# Pallas kernels
# --------------------------------------------------------------------------

def _voxelize_kernel(feat_ref, idx_ref, out_ref):
    # feat: (1, C+1, N) bf16 (last row = ones -> counts), idx: (1, N, 1) int32 flat
    # voxel ids in the extended layout, out: (1, C, VT) bf16 for V-tile program_id(1).
    c = out_ref.shape[1]
    vt = out_ref.shape[2]
    n = idx_ref.shape[1]
    v_base = pl.program_id(1) * vt

    cols = jax.lax.broadcasted_iota(jnp.int32, (n, vt), 1) + v_base        # (N, VT)
    onehot = jnp.where(cols == idx_ref[0], 1.0, 0.0).astype(jnp.bfloat16)  # (N, VT)

    acc = jnp.dot(feat_ref[0], onehot, preferred_element_type=jnp.float32)  # (C+1, VT)
    cnt = jnp.maximum(acc[c:c + 1, :], 1.0)                                 # (1, VT)
    out_ref[0] = (acc[0:c, :] * pl.reciprocal(cnt, approx=True)).astype(out_ref.dtype)


def _voxel_layers_kernel(x_ref, w1_ref, sc1_ref, sh1_ref, w2_ref, sc2_ref, sh2_ref,
                         mask_ref, out_ref, hext_ref, *, shifts, s_left, leak):
    # Fused voxel branch: Conv3d+BN+LeakyReLU -> Dropout(eval id) -> Conv3d+BN+LeakyReLU.
    # x: (1, C_in, Vext) bf16 zero-extended flat grid, w*: (k^3, C_out, C_*) bf16 taps,
    # sc/sh: (C_out, 1) folded BN scale/shift, mask: (1, Vout) interior mask,
    # out: (1, C_out, Vout) bf16, hext: VMEM scratch (C_out, Vext) bf16.
    c_out = out_ref.shape[1]
    v_out = out_ref.shape[2]
    v_ext = x_ref.shape[2]
    mask = mask_ref[...]                                            # (1, Vout)

    # ---- layer 1: k^3 shifted bf16 matmuls, f32 accumulation ----
    acc = jnp.zeros((c_out, v_out), jnp.float32)
    for t, s in enumerate(shifts):
        a = s_left + s
        xs = x_ref[0, :, a:a + v_out]                               # (C_in, Vout) bf16
        acc = acc + jnp.dot(w1_ref[t], xs, preferred_element_type=jnp.float32)
    h = acc * sc1_ref[...] + sh1_ref[...]
    h = jnp.where(h >= 0.0, h, leak * h)
    h = h * mask                                                    # zero border & tail
    # TODO(synk): Dropout(0.1) between the two conv blocks is eval-mode identity.

    # stage layer-1 output into the zero-extended scratch (aligned store) so the second
    # conv sees exact SAME zero padding.
    hext_ref[:, 0:s_left] = jnp.zeros((c_out, s_left), jnp.bfloat16)
    if v_ext > s_left + v_out:
        hext_ref[:, s_left + v_out:v_ext] = jnp.zeros(
            (c_out, v_ext - s_left - v_out), jnp.bfloat16)
    hext_ref[:, s_left:s_left + v_out] = h.astype(jnp.bfloat16)

    # ---- layer 2 ----
    acc2 = jnp.zeros((c_out, v_out), jnp.float32)
    for t, s in enumerate(shifts):
        a = s_left + s
        hs = hext_ref[:, a:a + v_out]                               # (C_out, Vout) bf16
        acc2 = acc2 + jnp.dot(w2_ref[t], hs, preferred_element_type=jnp.float32)
    y = acc2 * sc2_ref[...] + sh2_ref[...]
    y = jnp.where(y >= 0.0, y, leak * y)
    out_ref[0] = (y * mask).astype(out_ref.dtype)


def _shared_mlp_kernel(feat_ref, w_ref, b_ref, gmat_ref, gamma_ref, beta_ref, out_ref,
                       *, inv_count, eps):
    # SharedMLP (PVD style): Conv1d(1x1) + GroupNorm(8) + Swish, centered two-pass stats.
    y = jnp.dot(w_ref[...], feat_ref[0],
                preferred_element_type=jnp.float32) + b_ref[...]            # (C_out, N)
    gsum = jnp.dot(gmat_ref[...], jnp.sum(y, axis=1, keepdims=True),
                   preferred_element_type=jnp.float32)
    mean = gsum * inv_count                                                 # (C_out, 1)
    d = y - mean
    gssd = jnp.dot(gmat_ref[...], jnp.sum(d * d, axis=1, keepdims=True),
                   preferred_element_type=jnp.float32)
    var = gssd * inv_count
    z = d * jax.lax.rsqrt(var + eps) * gamma_ref[...] + beta_ref[...]
    out_ref[0] = z * jax.nn.sigmoid(z)                                      # Swish


def _devox_fuse_kernel(vox_ref, idx_ref, wgt_ref, pf_ref, out_ref):
    # Trilinear devoxelize (8 corners) + fused point-feature add, accumulated over
    # V-tiles.  vox: (1, C, VT) bf16, idx/wgt: (1, 8, N), pf/out: (1, C, N) f32.
    vt = vox_ref.shape[2]
    n = idx_ref.shape[2]
    v = pl.program_id(1)

    @pl.when(v == 0)
    def _():
        out_ref[0] = pf_ref[0]

    v_base = v * vt
    rows = jax.lax.broadcasted_iota(jnp.int32, (vt, n), 0) + v_base         # (VT, N)
    idx = idx_ref[0]                                                        # (8, N)
    wgt = wgt_ref[0]                                                        # (8, N)
    w_tile = jnp.zeros((vt, n), jnp.float32)
    for c in range(8):
        w_tile = w_tile + jnp.where(rows == idx[c:c + 1, :], wgt[c:c + 1, :], 0.0)
    out_ref[0] = out_ref[0] + jnp.dot(vox_ref[0], w_tile.astype(jnp.bfloat16),
                                      preferred_element_type=jnp.float32)


# --------------------------------------------------------------------------
# JAX glue + pallas_call wrappers
# --------------------------------------------------------------------------

def voxelize(features, coords, resolution, kernel_size, normalize=True, eps=0.0):
    """pvcnn Voxelization: normalize coords, scatter-mean into the (extended) flat grid."""
    B, C, N = features.shape
    r, p, rp, _, _, s_left, _, v_ext = _grid_geometry(resolution, kernel_size)

    norm_coords = coords - coords.mean(axis=2, keepdims=True)
    if normalize:
        denom = jnp.max(jnp.linalg.norm(norm_coords, axis=1, keepdims=True),
                        axis=2, keepdims=True) * 2.0 + eps
        norm_coords = norm_coords / denom + 0.5
    else:
        norm_coords = (norm_coords + 1.0) / 2.0
    norm_coords = jnp.clip(norm_coords * r, 0.0, r - 1.0)

    vox_ijk = jnp.round(norm_coords).astype(jnp.int32)                      # (B, 3, N)
    flat = (s_left
            + (vox_ijk[:, 0] + p) * rp * rp
            + (vox_ijk[:, 1] + p) * rp
            + (vox_ijk[:, 2] + p)).astype(jnp.int32)                        # (B, N)
    idx = flat[:, :, None]                                                  # (B, N, 1)

    feat1 = jnp.concatenate(
        [features, jnp.ones((B, 1, N), features.dtype)], axis=1).astype(jnp.bfloat16)

    vt = _pick_v_tile(v_ext)
    vox = pl.pallas_call(
        _voxelize_kernel,
        out_shape=jax.ShapeDtypeStruct((B, C, v_ext), jnp.bfloat16),
        grid=(B, v_ext // vt),
        in_specs=[pl.BlockSpec((1, C + 1, N), lambda b, v: (b, 0, 0)),
                  pl.BlockSpec((1, N, 1), lambda b, v: (b, 0, 0))],
        out_specs=pl.BlockSpec((1, C, vt), lambda b, v: (b, 0, v)),
        compiler_params=pltpu.CompilerParams(
            dimension_semantics=("parallel", "parallel")),
    )(feat1, idx)
    return vox, norm_coords


def voxel_layers(vox_ext, resolution, kernel_size, params, leak, bn_eps=1e-5):
    """Fused Conv3d+BN+LeakyReLU -> Dropout(eval) -> Conv3d+BN+LeakyReLU on the flat grid."""
    B, C_in, v_ext_in = vox_ext.shape
    r, p, rp, vp_raw, _, s_left, v_out, v_ext = _grid_geometry(resolution, kernel_size)
    assert v_ext == v_ext_in
    k = kernel_size
    k3 = k ** 3
    (w1, b1, g1, be1, m1, var1, w2, b2, g2, be2, m2, var2) = params
    C_out = w1.shape[0]

    def taps(w):
        # (C_out, C_i, k, k, k) -> (k^3, C_out, C_i), tap index t = i*k^2 + j*k + l.
        return jnp.transpose(w, (2, 3, 4, 0, 1)).reshape(
            k3, w.shape[0], w.shape[1]).astype(jnp.bfloat16)

    def fold(bias, gamma, beta, mean, var):
        s = gamma / jnp.sqrt(var + bn_eps)
        t = (bias - mean) * s + beta
        return (s.reshape(-1, 1).astype(jnp.float32),
                t.reshape(-1, 1).astype(jnp.float32))

    w1t, w2t = taps(w1), taps(w2)
    sc1, sh1 = fold(b1, g1, be1, m1, var1)
    sc2, sh2 = fold(b2, g2, be2, m2, var2)

    shifts = tuple((i - p) * rp * rp + (j - p) * rp + (l - p)
                   for i in range(k) for j in range(k) for l in range(k))

    # interior mask on the canonical (spatially padded, lane padded) flat grid
    jj = np.arange(vp_raw)
    xg = jj // (rp * rp)
    yg = (jj // rp) % rp
    zg = jj % rp
    interior = ((xg >= p) & (xg < p + r) & (yg >= p) & (yg < p + r)
                & (zg >= p) & (zg < p + r))
    mask_np = np.zeros((1, v_out), np.float32)
    mask_np[0, :vp_raw] = interior.astype(np.float32)
    mask = jnp.asarray(mask_np)

    kernel = functools.partial(_voxel_layers_kernel,
                               shifts=shifts, s_left=s_left, leak=float(leak))
    return pl.pallas_call(
        kernel,
        out_shape=jax.ShapeDtypeStruct((B, C_out, v_out), jnp.bfloat16),
        grid=(B,),
        in_specs=[pl.BlockSpec((1, C_in, v_ext), lambda b: (b, 0, 0)),
                  pl.BlockSpec((k3, C_out, C_in), lambda b: (0, 0, 0)),
                  pl.BlockSpec((C_out, 1), lambda b: (0, 0)),
                  pl.BlockSpec((C_out, 1), lambda b: (0, 0)),
                  pl.BlockSpec((k3, C_out, C_out), lambda b: (0, 0, 0)),
                  pl.BlockSpec((C_out, 1), lambda b: (0, 0)),
                  pl.BlockSpec((C_out, 1), lambda b: (0, 0)),
                  pl.BlockSpec((1, v_out), lambda b: (0, 0))],
        out_specs=pl.BlockSpec((1, C_out, v_out), lambda b: (b, 0, 0)),
        scratch_shapes=[pltpu.VMEM((C_out, v_ext), jnp.bfloat16)],
        compiler_params=pltpu.CompilerParams(
            dimension_semantics=("parallel",),
            vmem_limit_bytes=64 * 1024 * 1024),
    )(vox_ext, w1t, sc1, sh1, w2t, sc2, sh2, mask)


def trilinear_corners(norm_coords, resolution, kernel_size):
    """8 corner flat indices (canonical layout) and trilinear weights, shapes (B, 8, N)."""
    r, p, rp, *_ = _grid_geometry(resolution, kernel_size)
    c = jnp.clip(norm_coords, 0.0, r - 1.0)
    lo = jnp.floor(c)
    frac = c - lo
    lo_i = lo.astype(jnp.int32)
    hi_i = jnp.minimum(lo_i + 1, r - 1)

    idx_list, wgt_list = [], []
    for bx in (0, 1):
        ix = hi_i[:, 0] if bx else lo_i[:, 0]
        wx = frac[:, 0] if bx else 1.0 - frac[:, 0]
        for by in (0, 1):
            iy = hi_i[:, 1] if by else lo_i[:, 1]
            wy = frac[:, 1] if by else 1.0 - frac[:, 1]
            for bz in (0, 1):
                iz = hi_i[:, 2] if bz else lo_i[:, 2]
                wz = frac[:, 2] if bz else 1.0 - frac[:, 2]
                idx_list.append((ix + p) * rp * rp + (iy + p) * rp + (iz + p))
                wgt_list.append(wx * wy * wz)
    idx = jnp.stack(idx_list, axis=1).astype(jnp.int32)
    wgt = jnp.stack(wgt_list, axis=1).astype(jnp.float32)
    return idx, wgt


def shared_mlp(features, weight, bias, gn_gamma, gn_beta, num_groups=8, gn_eps=1e-5):
    """SharedMLP: Conv1d(1x1) + GroupNorm(num_groups) + Swish, fused in one Pallas kernel."""
    B, C_in, N = features.shape
    C_out = weight.shape[0]
    gsize = C_out // num_groups
    gid = jnp.arange(C_out) // gsize
    gmat = (gid[:, None] == gid[None, :]).astype(jnp.float32)          # (C_out, C_out)
    inv_count = 1.0 / float(gsize * N)

    kernel = functools.partial(_shared_mlp_kernel, inv_count=inv_count, eps=gn_eps)
    return pl.pallas_call(
        kernel,
        out_shape=jax.ShapeDtypeStruct((B, C_out, N), jnp.float32),
        grid=(B,),
        in_specs=[pl.BlockSpec((1, C_in, N), lambda b: (b, 0, 0)),
                  pl.BlockSpec((C_out, C_in), lambda b: (0, 0)),
                  pl.BlockSpec((C_out, 1), lambda b: (0, 0)),
                  pl.BlockSpec((C_out, C_out), lambda b: (0, 0)),
                  pl.BlockSpec((C_out, 1), lambda b: (0, 0)),
                  pl.BlockSpec((C_out, 1), lambda b: (0, 0))],
        out_specs=pl.BlockSpec((1, C_out, N), lambda b: (b, 0, 0)),
        compiler_params=pltpu.CompilerParams(dimension_semantics=("parallel",)),
    )(features.astype(jnp.bfloat16), weight.astype(jnp.bfloat16),
      bias.reshape(C_out, 1), gmat, gn_gamma.reshape(C_out, 1), gn_beta.reshape(C_out, 1))


def devoxelize_and_fuse(vox_out, corner_idx, corner_wgt, point_feat):
    """Trilinear devoxelize (accumulated over V-tiles) + fused point-feature add."""
    B, C, v_out = vox_out.shape
    N = point_feat.shape[-1]
    vt = _pick_v_tile(v_out)
    return pl.pallas_call(
        _devox_fuse_kernel,
        out_shape=jax.ShapeDtypeStruct((B, C, N), jnp.float32),
        grid=(B, v_out // vt),
        in_specs=[pl.BlockSpec((1, C, vt), lambda b, v: (b, 0, v)),
                  pl.BlockSpec((1, 8, N), lambda b, v: (b, 0, 0)),
                  pl.BlockSpec((1, 8, N), lambda b, v: (b, 0, 0)),
                  pl.BlockSpec((1, C, N), lambda b, v: (b, 0, 0))],
        out_specs=pl.BlockSpec((1, C, N), lambda b, v: (b, 0, 0)),
        compiler_params=pltpu.CompilerParams(
            dimension_semantics=("parallel", "arbitrary")),
    )(vox_out, corner_idx, corner_wgt, point_feat)


# --------------------------------------------------------------------------
# Module
# --------------------------------------------------------------------------

class PVConvReLUPallas:
    """Forward-pass (eval mode) equivalent of grasp_ldm / PVD PVConvReLU."""

    def __init__(self, in_channels, out_channels, kernel_size, resolution,
                 leak=0.2, normalize=True, eps=0.0, key=None):
        self.in_channels = in_channels
        self.out_channels = out_channels
        self.k = kernel_size
        self.r = int(resolution)
        self.leak = leak
        self.normalize = normalize
        self.eps = eps

        if key is None:
            key = jax.random.PRNGKey(42)
        ks = jax.random.split(key, 12)
        co, ci, k = out_channels, in_channels, kernel_size

        # voxel branch: Conv3d -> BN3d -> LeakyReLU -> (Dropout) -> Conv3d -> BN3d -> LeakyReLU
        self.w1 = jax.random.normal(ks[0], (co, ci, k, k, k), jnp.float32) * 0.1
        self.b1 = jax.random.normal(ks[1], (co,), jnp.float32) * 0.05
        self.bn1_gamma = 1.0 + 0.1 * jax.random.normal(ks[2], (co,), jnp.float32)
        self.bn1_beta = 0.05 * jax.random.normal(ks[3], (co,), jnp.float32)
        self.bn1_mean = 0.05 * jax.random.normal(ks[4], (co,), jnp.float32)
        self.bn1_var = 0.5 + jnp.abs(jax.random.normal(ks[5], (co,), jnp.float32)) * 0.2

        self.w2 = jax.random.normal(ks[6], (co, co, k, k, k), jnp.float32) * 0.1
        self.b2 = jax.random.normal(ks[7], (co,), jnp.float32) * 0.05
        self.bn2_gamma = 1.0 + 0.1 * jax.random.normal(ks[8], (co,), jnp.float32)
        self.bn2_beta = 0.05 * jax.random.normal(ks[9], (co,), jnp.float32)
        self.bn2_mean = 0.05 * jax.random.normal(ks[10], (co,), jnp.float32)
        self.bn2_var = 0.5 + jnp.abs(jax.random.normal(ks[11], (co,), jnp.float32)) * 0.2

        kp = jax.random.split(jax.random.fold_in(key, 7), 4)
        # point branch: SharedMLP = Conv1d(1x1) -> GroupNorm(8) -> Swish
        self.wp = jax.random.normal(kp[0], (co, ci), jnp.float32) * 0.2
        self.bp = jax.random.normal(kp[1], (co,), jnp.float32) * 0.05
        self.gn_gamma = 1.0 + 0.1 * jax.random.normal(kp[2], (co,), jnp.float32)
        self.gn_beta = 0.05 * jax.random.normal(kp[3], (co,), jnp.float32)

    def __call__(self, inputs):
        features, coords, temb = inputs          # features (B, C_in, N), coords (B, 3, N)

        vox_ext, norm_coords = voxelize(features, coords, self.r, self.k,
                                        normalize=self.normalize, eps=self.eps)

        conv_params = (self.w1, self.b1, self.bn1_gamma, self.bn1_beta,
                       self.bn1_mean, self.bn1_var,
                       self.w2, self.b2, self.bn2_gamma, self.bn2_beta,
                       self.bn2_mean, self.bn2_var)
        h = voxel_layers(vox_ext, self.r, self.k, conv_params, self.leak)

        corner_idx, corner_wgt = trilinear_corners(norm_coords, self.r, self.k)
        pf = shared_mlp(features, self.wp, self.bp, self.gn_gamma, self.gn_beta,
                        num_groups=8)

        fused = devoxelize_and_fuse(h, corner_idx, corner_wgt, pf)
        return fused, coords, temb


# --------------------------------------------------------------------------
# main
# --------------------------------------------------------------------------

if __name__ == "__main__":
    B, C_in, C_out, N, R, K = 2, 4, 8, 32, 4, 3

    key = jax.random.PRNGKey(0)
    k1, k2, k3 = jax.random.split(key, 3)
    features = jax.random.normal(k1, (B, C_in, N), jnp.float32)
    coords = jax.random.normal(k2, (B, 3, N), jnp.float32)
    temb = jax.random.normal(k3, (B, 16, N), jnp.float32)

    model = PVConvReLUPallas(C_in, C_out, K, R, key=jax.random.PRNGKey(1))
    out_feat, out_coords, out_temb = model((features, coords, temb))
    out_feat = jax.block_until_ready(out_feat)

    assert out_feat.shape == (B, C_out, N)
    assert bool(jnp.all(jnp.isfinite(out_feat)))
    assert out_coords.shape == coords.shape and out_temb.shape == temb.shape
    print("KERNEL_OK")
</pallas_src>

<mosaic_0001>
module attributes {stable_mosaic.version = 11 : i64} {
  func.func @_voxelize_kernel(%arg0: i32, %arg1: i32, %arg2: memref<1x5x32xbf16, #tpu.memory_space<vmem>>, %arg3: memref<1x32x1xi32, #tpu.memory_space<vmem>>, %arg4: memref<1x4x256xbf16, #tpu.memory_space<vmem>>) attributes {dimension_semantics = [#tpu.dimension_semantics<parallel>, #tpu.dimension_semantics<parallel>], iteration_bounds = array<i64: 2, 2>, scalar_prefetch = 0 : i64, scratch_operands = 0 : i64, tpu.core_type = #tpu.core_type<tc>, window_params = [{transform_indices = @transform_0, window_bounds = array<i64: 1, 5, 32>}, {transform_indices = @transform_1, window_bounds = array<i64: 1, 32, 1>}, {transform_indices = @transform_2, window_bounds = array<i64: 1, 4, 256>}]} {
    %c256_i32 = arith.constant 256 : i32
    %0 = arith.muli %arg1, %c256_i32 : i32
    %1 = tpu.iota {dimensions = array<i32: 1>} : vector<32x256xi32>
    %2 = vector.broadcast %0 : i32 to vector<32x256xi32>
    %3 = arith.addi %1, %2 : vector<32x256xi32>
    %c0 = arith.constant 0 : index
    %c0_0 = arith.constant 0 : index
    %c0_1 = arith.constant 0 : index
    %4 = vector.load %arg3[%c0, %c0_0, %c0_1] : memref<1x32x1xi32, #tpu.memory_space<vmem>>, vector<1x32x1xi32>
    %5 = vector.shape_cast %4 : vector<1x32x1xi32> to vector<32x1xi32>
    %6 = vector.broadcast %5 : vector<32x1xi32> to vector<32x256xi32>
    %7 = arith.cmpi eq, %3, %6 : vector<32x256xi32>
    %cst = arith.constant 1.000000e+00 : f32
    %cst_2 = arith.constant 0.000000e+00 : f32
    %8 = vector.broadcast %cst : f32 to vector<32x256xf32>
    %9 = vector.broadcast %cst_2 : f32 to vector<32x256xf32>
    %10 = arith.select %7, %8, %9 : vector<32x256xi1>, vector<32x256xf32>
    %11 = arith.truncf %10 : vector<32x256xf32> to vector<32x256xbf16>
    %c0_3 = arith.constant 0 : index
    %c0_4 = arith.constant 0 : index
    %c0_5 = arith.constant 0 : index
    %12 = vector.load %arg2[%c0_3, %c0_4, %c0_5] : memref<1x5x32xbf16, #tpu.memory_space<vmem>>, vector<1x5x32xbf16>
    %13 = vector.shape_cast %12 : vector<1x5x32xbf16> to vector<5x32xbf16>
    %cst_6 = arith.constant dense<0.000000e+00> : vector<5x256xf32>
    %14 = tpu.matmul %13, %11, %cst_6 {dimension_numbers = #tpu.dot_dimension_numbers<[1], [0], [0], [1], [0, 0, 1, 1], [], []>} : vector<5x32xbf16>, vector<32x256xbf16>, vector<5x256xf32> -> vector<5x256xf32>
    %15 = vector.extract_strided_slice %14 {offsets = [4, 0], sizes = [1, 256], strides = [1, 1]} : vector<5x256xf32> to vector<1x256xf32>
    %cst_7 = arith.constant 1.000000e+00 : f32
    %16 = vector.broadcast %cst_7 : f32 to vector<1x256xf32>
    %17 = arith.maximumf %15, %16 : vector<1x256xf32>
    %18 = vector.extract_strided_slice %14 {offsets = [0, 0], sizes = [4, 256], strides = [1, 1]} : vector<5x256xf32> to vector<4x256xf32>
    %19 = tpu.reciprocal %17 {approx = true} : vector<1x256xf32> -> vector<1x256xf32>
    %20 = vector.broadcast %19 : vector<1x256xf32> to vector<4x256xf32>
    %21 = arith.mulf %18, %20 : vector<4x256xf32>
    %22 = arith.truncf %21 : vector<4x256xf32> to vector<4x256xbf16>
    %c0_8 = arith.constant 0 : index
    %c0_9 = arith.constant 0 : index
    %c0_10 = arith.constant 0 : index
    %23 = vector.load %arg4[%c0_8, %c0_9, %c0_10] : memref<1x4x256xbf16, #tpu.memory_space<vmem>>, vector<1x4x256xbf16>
    %24 = vector.shape_cast %23 : vector<1x4x256xbf16> to vector<4x256xbf16>
    %25 = vector.shape_cast %22 : vector<4x256xbf16> to vector<1x4x256xbf16>
    tpu.vector_store %arg4[%c0_8, %c0_9, %c0_10], %25 {strides = array<i32>} : memref<1x4x256xbf16, #tpu.memory_space<vmem>>, vector<1x4x256xbf16>,
    return
  }
  func.func @transform_0(%arg0: i32, %arg1: i32) -> (i32, i32, i32) {
    %c0_i32 = arith.constant 0 : i32
    %c0_i32_0 = arith.constant 0 : i32
    %c0_i32_1 = arith.constant 0 : i32
    return %arg0, %c0_i32, %c0_i32_0 : i32, i32, i32
  }
  func.func @transform_1(%arg0: i32, %arg1: i32) -> (i32, i32, i32) {
    %c0_i32 = arith.constant 0 : i32
    %c0_i32_0 = arith.constant 0 : i32
    %c0_i32_1 = arith.constant 0 : i32
    return %arg0, %c0_i32, %c0_i32_0 : i32, i32, i32
  }
  func.func @transform_2(%arg0: i32, %arg1: i32) -> (i32, i32, i32) {
    %c0_i32 = arith.constant 0 : i32
    %c0_i32_0 = arith.constant 0 : i32
    return %arg0, %c0_i32, %arg1 : i32, i32, i32
  }
}

</mosaic_0001>

<llo_original>
// kernel: tpu_custom_call.1
$region0: #{tpu_custom_call.1}
  #allocation0 [shape = 'u32[]', space=smem, size = 0x4, offset = 0x4, fixed_abs, tag = 'smem constant byte address 0x4 - core index']
  #allocation1 [shape = 'u32[144,128]{1,0:T(1,128)}', space=vmem, size = 0x12000, scoped, tag = 'internal scratch']
  %s0 = inlined_call_operand.vmem [shape: bf16[2,5,32], index: 0, kind: input, shape index: {}]
  %s1 = inlined_call_operand.vmem [shape: s32[2,32,1], index: 1, kind: input, shape index: {}]
  %s2 = inlined_call_operand.hbm [shape: bf16[2,4,512], index: 2, kind: output, shape index: {}]
  %s3 = sld [smem:[#allocation0]]
  $region41: #{tpu_custom_call.1} parent=0
    _
  %s5 = ssub.s32 1, %s3
  %s6 = scalar_select 0, %s5, %s3
  $region1: #{tpu_custom_call.1} parent=0
    #allocation2 [shape = 'u8[4096]{0}', space=vmem, size = 0x1000, scoped, tag = 'output window, operand 0']
    #allocation3 [shape = 's32[2]{0}', space=sflag, size = 0x8, scoped, tag = 'scoped memory for tpu_custom_call.1']
    %7 = vsyncpa [#allocation3], 0
    %s8 = scalar_lea.sflag [#allocation3], 1
    %9 = vsyncpa %s8, 0
    loop: start=0, step=1, limit=6
    $region2: #{tpu_custom_call.1} parent=1 // loop_pre_header
      _
    $region3: #{tpu_custom_call.1} parent=1 // loop_header
      %s11 = sphi 0, %s15
      %p12 = scmp.ge.s32.totalorder %s11, 6
      %s18 = sphi 0, %s30
      %s19 = sphi 0, %s26
      %s20 = sphi 0, %s18
      %s21 = sphi 0, %s19
      %s22 = sphi 0, %s20
      %s23 = sphi 0, %s21
      %s33 = sphi 0, %s35
      %s36 = sphi 0, %s33
      %s37 = sphi 0, %s36
      %s53 = sphi 0, %s37
      %s59 = sphi 0, %s61
      %s62 = sphi 0, %s59
      %s63 = sphi 0, %s62
      %s79 = sphi 0, %s63
      %s87 = sphi 0, %s89
      %s90 = sphi 0, %s87
      %s91 = sphi 0, %s90
      %s107 = sphi 0, %s91
    $region4: #{tpu_custom_call.1} parent=1 // loop_header_branch
      %14 = sbr.rel (%p12) target = $region8
    $region5: #{tpu_custom_call.1} parent=1 // loop_body
      %s16 = ssub.s32 %s11, 1
      %s17 = ssub.s32 %s11, 2
      %s24 = sadd.s32 1, %s19
      %p25 = scmp.ge.s32.totalorder %s24, 2
      %s26 = scalar_select %p25, 0, %s24
      %s27 = sadd.s32 1, %s18
      %s28 = scalar_select %p25, %s27, %s18
      %p29 = scmp.ge.s32.totalorder %s28, 2
      %s30 = scalar_select %p29, 0, %s28
      %s31 = ssub.s32 %s18, %s30
      %p32 = scmp.eq.s32.totalorder %s31, 0
      %s34 = sadd.s32 %s33, 1
      %s35 = scalar_select %p32, %s33, %s34
      %p38 = pneg %p32
      %p39 = scmp.eq.s32.totalorder %s11, 3
      %p40 = por %p38, %p39
      %p41 = scmp.ne.s32.totalorder %s33, %s36
      %p42 = scmp.eq.s32.totalorder %s11, 0
      %p43 = por %p41, %p42
      %p44 = scmp.ne.s32.totalorder %s33, %s36
      %p45 = scmp.eq.s32.totalorder %s16, 3
      %p46 = por %p44, %p45
      %p47 = scmp.ne.s32.totalorder %s36, %s37
      %p48 = scmp.eq.s32.totalorder %s16, 0
      %p49 = por %p47, %p48
      %p50 = scmp.ne.s32.totalorder %s36, %s37
      %p51 = scmp.eq.s32.totalorder %s17, 3
      %p52 = por %p50, %p51
      %p54 = scmp.ne.s32.totalorder %s37, %s53
      %p55 = scmp.eq.s32.totalorder %s17, 0
      %p56 = por %p54, %p55
      %s57 = ssub.s32 %s18, %s30
      %p58 = scmp.eq.s32.totalorder %s57, 0
      %s60 = sadd.s32 %s59, 1
      %s61 = scalar_select %p58, %s59, %s60
      %p64 = pneg %p58
      %p65 = scmp.eq.s32.totalorder %s11, 3
      %p66 = por %p64, %p65
      %p67 = scmp.ne.s32.totalorder %s59, %s62
      %p68 = scmp.eq.s32.totalorder %s11, 0
      %p69 = por %p67, %p68
      %p70 = scmp.ne.s32.totalorder %s59, %s62
      %p71 = scmp.eq.s32.totalorder %s16, 3
      %p72 = por %p70, %p71
      %p73 = scmp.ne.s32.totalorder %s62, %s63
      %p74 = scmp.eq.s32.totalorder %s16, 0
      %p75 = por %p73, %p74
      %p76 = scmp.ne.s32.totalorder %s62, %s63
      %p77 = scmp.eq.s32.totalorder %s17, 3
      %p78 = por %p76, %p77
      %p80 = scmp.ne.s32.totalorder %s63, %s79
      %p81 = scmp.eq.s32.totalorder %s17, 0
      %p82 = por %p80, %p81
      %s83 = ssub.s32 %s18, %s30
      %s84 = ssub.s32 %s19, %s26
      %s85 = sor.u32 %s83, %s84
      %p86 = scmp.eq.s32.totalorder %s85, 0
      %s88 = sadd.s32 %s87, 1
      %s89 = scalar_select %p86, %s87, %s88
      %p92 = pneg %p86
      %p93 = scmp.eq.s32.totalorder %s11, 3
      %p94 = por %p92, %p93
      %p95 = scmp.ne.s32.totalorder %s87, %s90
      %p96 = scmp.eq.s32.totalorder %s11, 0
      %p97 = por %p95, %p96
      %p98 = scmp.ne.s32.totalorder %s87, %s90
      %p99 = scmp.eq.s32.totalorder %s16, 3
      %p100 = por %p98, %p99
      %p101 = scmp.ne.s32.totalorder %s90, %s91
      %p102 = scmp.eq.s32.totalorder %s16, 0
      %p103 = por %p101, %p102
      %p104 = scmp.ne.s32.totalorder %s90, %s91
      %p105 = scmp.eq.s32.totalorder %s17, 3
      %p106 = por %p104, %p105
      %p108 = scmp.ne.s32.totalorder %s91, %s107
      %p109 = scmp.eq.s32.totalorder %s17, 0
      %p110 = por %p108, %p109
      %p111 = scmp.le.s32.totalorder 1, %s11
      %p112 = scmp.lt.s32.totalorder %s11, 5
      %p113 = pnand %p111, %p112
      %p114 = pneg %p113
      // Predicated region
      $region9: #{tpu_custom_call.1} parent=5 // pred_check
        _
      $region10: #{tpu_custom_call.1} parent=5 // pred_check_branch
        %116 = sbr.rel (%p113) target = $region12
      $region11: #{tpu_custom_call.1} parent=5 // pred_region
        %s117 = ssub.s32 %s11, 1
      $region12: #{tpu_custom_call.1} parent=5 // pred_fallthru
        _
      %p118 = scmp.lt.s32.totalorder %s11, 4
      // Predicated region
      $region13: #{tpu_custom_call.1} parent=5 // pred_check
        %p119 = pneg %p118
      $region14: #{tpu_custom_call.1} parent=5 // pred_check_branch
        %121 = sbr.rel (%p119) target = $region16
      $region15: #{tpu_custom_call.1} parent=5 // pred_region
        // Predicated region
        $region17: #{tpu_custom_call.1} parent=15 // pred_check
          %p122 = pneg %p43
        $region18: #{tpu_custom_call.1} parent=15 // pred_check_branch
          %124 = sbr.rel (%p122) target = $region20
        $region19: #{tpu_custom_call.1} parent=15 // pred_region
          %p125 = scmp.lt.s32.totalorder %s18, 1
          %s126 = scalar_select %p125, %s18, 1
          %s127 = smul.addr %s126, 4
          %s128 = scalar_lea.vmem %s0, %s127
        $region20: #{tpu_custom_call.1} parent=15 // pred_fallthru
          _
        // Predicated region
        $region21: #{tpu_custom_call.1} parent=15 // pred_check
          %p129 = pneg %p69
        $region22: #{tpu_custom_call.1} parent=15 // pred_check_branch
          %131 = sbr.rel (%p129) target = $region24
        $region23: #{tpu_custom_call.1} parent=15 // pred_region
          %p132 = scmp.lt.s32.totalorder %s18, 1
          %s133 = scalar_select %p132, %s18, 1
          %s134 = smul.addr %s133, 4
          %s135 = smul.addr %s134, 8
          %s136 = scalar_lea.vmem %s1, %s135
        $region24: #{tpu_custom_call.1} parent=15 // pred_fallthru
          _
      $region16: #{tpu_custom_call.1} parent=5 // pred_fallthru
        _
      %p137 = scmp.le.s32.totalorder 1, %s11
      %p138 = scmp.lt.s32.totalorder %s11, 5
      %p139 = pnand %p137, %p138
      %p140 = pneg %p139
      // Predicated region
      $region25: #{tpu_custom_call.1} parent=5 // pred_check
        _
      $region26: #{tpu_custom_call.1} parent=5 // pred_check_branch
        %142 = sbr.rel (%p139) target = $region28
      $region27: #{tpu_custom_call.1} parent=5 // pred_region
        %s143 = ssub.s32 %s11, 1
        %p144 = scmp.lt.s32.totalorder %s20, 1
        %s145 = scalar_select %p144, %s20, 1
        %s146 = smul.addr %s145, 4
        %s147 = scalar_lea.vmem %s0, %s146
        %p148 = pneg %p49
        %p149 = pneg %p46
        %p150 = scmp.lt.s32.totalorder %s20, 1
        %s151 = scalar_select %p150, %s20, 1
        %s152 = smul.addr %s151, 4
        %s153 = smul.addr %s152, 8
        %s154 = scalar_lea.vmem %s1, %s153
        %p155 = pneg %p75
        %p156 = pneg %p72
        %p157 = pneg %p103
        %p158 = pneg %p100
        %s159 = sand.u32 %s90, 1
        %s160 = scalar_lea.sflag [#allocation3], %s159
        %s161 = sand.u32 %s90, 1
        %s162 = smul.addr %s161, 4
        %s163 = scalar_lea.vmem [#allocation2], %s162
        %p164 = scmp.lt.s32.totalorder %s20, 1
        %s165 = scalar_select %p164, %s20, 1
        %s166 = smul.addr %s165, 4
        %s167 = scalar_lea.vmem %s0, %s166
        %p168 = scmp.lt.s32.totalorder %s20, 1
        %s169 = scalar_select %p168, %s20, 1
        %s170 = smul.addr %s169, 4
        %s171 = smul.addr %s170, 8
        %s172 = scalar_lea.vmem %s1, %s171
        %s173 = smul.u32 2, %s21
        %s175 = smul.u32 %s21, 256
        %v176 = vlaneseq
        %v177 = vand.u32 %v176, 127
        %v178 = vadd.s32 %v177, 128
        %v179 = vstv %s175
        %v180 = vadd.s32 %v177, %v179
        %v181 = vadd.s32 %v178, %v179
        %v182 = vld [vmem:[%s172] sm:$0xff]
        %v183 = vld [vmem:[%s172 + $0x8] sm:$0xff]
        %v184 = vld [vmem:[%s172 + $0x10] sm:$0xff]
        %v185 = vld [vmem:[%s172 + $0x18] sm:$0xff]
        %186 = vset.pattern.permute.xlu0 0
        %187 = vperm.xlu0 %186, %v182
        %v188 = vpop.permute.xlu0 %187
        %189 = vset.pattern.permute.xlu0 0
        %190 = vperm.xlu0 %189, %v183
        %v191 = vpop.permute.xlu0 %190
        %192 = vset.pattern.permute.xlu0 0
        %193 = vperm.xlu0 %192, %v184
        %v194 = vpop.permute.xlu0 %193
        %195 = vset.pattern.permute.xlu0 0
        %196 = vperm.xlu0 %195, %v185
        %v197 = vpop.permute.xlu0 %196
        %vm198 = vcmp.eq.s32.totalorder %v180, %v188
        %vm199 = vcmp.eq.s32.totalorder %v181, %v188
        %vm200 = vcmp.eq.s32.totalorder %v180, %v191
        %vm201 = vcmp.eq.s32.totalorder %v181, %v191
        %vm202 = vcmp.eq.s32.totalorder %v180, %v194
        %vm203 = vcmp.eq.s32.totalorder %v181, %v194
        %vm204 = vcmp.eq.s32.totalorder %v180, %v197
        %vm205 = vcmp.eq.s32.totalorder %v181, %v197
        %v206 = vsel %vm198, 1.0, 0.0
        %v207 = vsel %vm199, 1.0, 0.0
        %v208 = vsel %vm200, 1.0, 0.0
        %v209 = vsel %vm201, 1.0, 0.0
        %v210 = vsel %vm202, 1.0, 0.0
        %v211 = vsel %vm203, 1.0, 0.0
        %v212 = vsel %vm204, 1.0, 0.0
        %v213 = vsel %vm205, 1.0, 0.0
        %v214 = vpack.c.bf16 %v208, %v206
        %v215 = vpack.c.bf16 %v209, %v207
        %v216 = vpack.c.bf16 %v212, %v210
        %v217 = vpack.c.bf16 %v213, %v211
        %v218 = vld [vmem:[%s167] sm:$0x7]
        %vm219 = vcmask 261120
        %v221 = vsel %vm219, %v218, 0
        %223 = vmatprep.subr.bf16.mxu0 %v215
        %224 = vmatpush1.bf16.msra.mxu0 %v214
        %225 = vmatprep.subr.bf16.mxu0 %v217
        %226 = vmatpush1.bf16.msra.mxu0 %v216
        %227 = vmatprep.subr.bf16.mxu0 0
        %228 = vmatpush1.bf16.msra.mxu0 0
        %229 = vmatprep.subr.bf16.mxu0 0
        %230 = vmatpush1.bf16.msra.mxu0 0
        %231 = vmatprep.subr.bf16.mxu0 0
        %232 = vmatpush1.bf16.msra.mxu0 0
        %233 = vmatprep.subr.bf16.mxu0 0
        %234 = vmatpush1.bf16.msra.mxu0 0
        %235 = vmatprep.subr.bf16.mxu0 0
        %236 = vmatpush1.bf16.msra.mxu0 0
        %237 = vmatprep.subr.bf16.mxu0 0
        %238 = vmatpush1.bf16.msra.mxu0 0
        %239 = vmatprep.subr.bf16.mxu0 0
        %240 = vmatpush1.bf16.msra.mxu0 0
        %241 = vmatprep.subr.bf16.mxu0 0
        %242 = vmatpush1.bf16.msra.mxu0 0
        %243 = vmatprep.subr.bf16.mxu0 0
        %244 = vmatpush1.bf16.msra.mxu0 0
        %245 = vmatprep.subr.bf16.mxu0 0
        %246 = vmatpush1.bf16.msra.mxu0 0
        %247 = vmatprep.subr.bf16.mxu0 0
        %248 = vmatpush1.bf16.msra.mxu0 0
        %249 = vmatprep.subr.bf16.mxu0 0
        %250 = vmatpush1.bf16.msra.mxu0 0
        %251 = vmatprep.subr.bf16.mxu0 0
        %252 = vmatpush1.bf16.msra.mxu0 0
        %253 = vmatprep.subr.bf16.mxu0 0
        %254 = vmatpush1.bf16.msra.mxu0 0
        %255 = vmatprep.mubr.bf16.mxu0 0
        %256 = vmatmul.mubr.bf16.gmra.mrb[0].mxu0 %v221
        %v257 = vpop.f32.mrb[0].mxu0
        %v258 = vadd.f32 0.0, %v257
        %v259 = vpop.f32.mrb[0].mxu0
        %v260 = vadd.f32 0.0, %v259
        %v261 = vpop.f32.mrb[0].mxu0
        %v262 = vpop.f32.mrb[0].mxu0
        %263 = vdwg.mxu0
        %v264 = vmax.f32 %v258, 1.0
        %v265 = vmax.f32 %v260, 1.0
        %v266 = vrcp.pop %v264
        %v267 = vrcp.pop %v265
        %v268 = vlaneseq
        %v269 = vshrl.u32 %v268, 7
        %v270 = vsub.s32 4, %v269
        %v271 = vrot.slane %v266, %v270
        %v272 = vlaneseq
        %v273 = vshrl.u32 %v272, 7
        %v274 = vsub.s32 4, %v273
        %v275 = vrot.slane %v267, %v274
        %v276 = vmul.f32 %v258, %v271
        %v277 = vmul.f32 %v260, %v275
        %v278 = vpack.c.bf16 %v276, %v276
        %v279 = vpack.c.bf16 %v277, %v277
        %v282 = vcombine.low %v278, %v279
        %v284 = vunpack.c.l.s4 1983009808
        %v285 = vunpack.c.0.s8 %v284
        %v286 = vlaneseq
        %v287 = vshrl.u32 %v286, 7
        %v288 = vsub.s32 %v285, %v287
        %v289 = vrot.slane %v282, %v288
        %291 = vst [vmem:[%s163] sm:$0xf] %v289
        %s292 = sand.u32 %s90, 1
        %s293 = scalar_lea.sflag [#allocation3], %s292
        %s294 = sand.u32 %s90, 1
        %s295 = smul.addr %s294, 4
        %s296 = scalar_lea.vmem [#allocation2], %s295
        // Predicated region
        $region29: #{tpu_custom_call.1} parent=27 // pred_check
          %p297 = pneg %p100
        $region30: #{tpu_custom_call.1} parent=27 // pred_check_branch
          %299 = sbr.rel (%p297) target = $region32
        $region31: #{tpu_custom_call.1} parent=27 // pred_region
          %s300 = smul.u32 2, %s21
          %s302 = ssub.s32 64, 64
          %303 = vsyncadd %s293, %s302
          %s304 = smul.addr %s20, 4
          %s305 = sadd.s32 %s300, %s304
          %s306 = smul.addr %s305, 32
          %s307 = scalar_lea.hbm %s2, %s306
          %s309 = sshll.u32 %s296, 4
          %s310 = int_to_ptr.vmem [resolvable:$true] %s309
          %312 = dma.vmem_to_hbm [thread:$0]  %s310, 64, %s307, %s293
        $region32: #{tpu_custom_call.1} parent=27 // pred_fallthru
          _
      $region28: #{tpu_custom_call.1} parent=5 // pred_fallthru
        _
      %p313 = scmp.le.s32.totalorder 2, %s11
      // Predicated region
      $region33: #{tpu_custom_call.1} parent=5 // pred_check
        %p314 = pneg %p313
      $region34: #{tpu_custom_call.1} parent=5 // pred_check_branch
        %316 = sbr.rel (%p314) target = $region36
      $region35: #{tpu_custom_call.1} parent=5 // pred_region
        %s317 = ssub.s32 %s11, 2
        // Predicated region
        $region37: #{tpu_custom_call.1} parent=35 // pred_check
          %p318 = pneg %p106
        $region38: #{tpu_custom_call.1} parent=35 // pred_check_branch
          %320 = sbr.rel (%p318) target = $region40
        $region39: #{tpu_custom_call.1} parent=35 // pred_region
          %s321 = sand.u32 %s91, 1
          %s322 = scalar_lea.sflag [#allocation3], %s321
          %s323 = sand.u32 %s91, 1
          %s324 = smul.addr %s323, 4
          %s325 = scalar_lea.vmem [#allocation2], %s324
          %326 = dma.done %s322, 64
        $region40: #{tpu_custom_call.1} parent=35 // pred_fallthru
          _
      $region36: #{tpu_custom_call.1} parent=5 // pred_fallthru
        _
    $region6: #{tpu_custom_call.1} parent=1 // loop_footer
      %s15 = sadd.s32 1, %s11
    $region7: #{tpu_custom_call.1} parent=1 // loop_footer_branch
      %10 = sbr.rel target = $region3
    $region8: #{tpu_custom_call.1} parent=1 // loop_exit
      _
    %327 = vsyncpa [#allocation3], 1
    %s328 = scalar_lea.sflag [#allocation3], 1
    %329 = vsyncpa %s328, 1

</llo_original>
